<compile_context>
chip_gen: v6e
topology: v6e:2x2x1
jax: 0.10.0
libtpu: 0.0.40
codegen_flags: <defaults>
</compile_context>

<pallas_src>
import functools

import jax
import jax.numpy as jnp
from jax.experimental import pallas as pl
from jax.experimental.pallas import tpu as pltpu

EPS = 1e-5


# --------------------------------------------------------------------------
# Kernels
# --------------------------------------------------------------------------
def _fwd_train_kernel(x_ref, lg_ref, beta_ref, z_ref, mean_ref, var_ref):
    """Training forward: batch mean/var over the leading (batch) axis, then a
    single fused scale/shift FMA per element. Stats are emitted so the wrapper
    can compute dlogdet and the running-buffer updates."""
    x = x_ref[...].astype(jnp.float32)          # (B, tk, 128)
    lg = lg_ref[...].astype(jnp.float32)        # (tk, 128)
    bt = beta_ref[...].astype(jnp.float32)      # (tk, 128)

    inv_b = 1.0 / x.shape[0]
    mean = jnp.sum(x, axis=0) * inv_b                       # (tk, 128)  VPU adds
    var = jnp.sum((x - mean) ** 2, axis=0) * inv_b + EPS    # (tk, 128)

    inv_std = jax.lax.rsqrt(var)                 # EUP, (tk,128) footprint only
    scale = jnp.exp(lg) * inv_std
    shift = bt - scale * mean

    z_ref[...] = (x * scale + shift).astype(z_ref.dtype)    # 1 mul + 1 add / elem
    mean_ref[...] = mean
    var_ref[...] = var


def _affine_kernel(x_ref, scale_ref, shift_ref, z_ref):
    """Reverse pass / eval forward: pure streaming FMA with precomputed
    per-feature scale & shift (computed in plain JAX from running stats)."""
    x = x_ref[...].astype(jnp.float32)
    z_ref[...] = (x * scale_ref[...] + shift_ref[...]).astype(z_ref.dtype)


# --------------------------------------------------------------------------
# Tiling helpers
# --------------------------------------------------------------------------
def _round_up(n, m):
    return (n + m - 1) // m * m


def _vmem_capacity_bytes():
    try:
        return int(pltpu.get_tpu_info().vmem_capacity_bytes)
    except Exception:
        # Conservative fallback (v7x per-TC VMEM).
        return 64 * 1024 * 1024


def _pick_tile_k(B, K, itemsize, vmem_cap):
    """Largest tile (in 128-lane column groups) that (a) keeps the
    double-buffered per-step footprint within ~1/4 of VMEM and (b) keeps the
    x block around a few MiB so the grid still splits for megacore."""
    budget = vmem_cap // 4
    target_x_block = 4 * 1024 * 1024  # ~4 MiB x-block target

    def db_footprint(tk):
        # double-buffered: x + z blocks (B rows each) + up to 4 (tk,128) blocks, f32
        return 2 * 4 * 128 * tk * (2 * B + 4)

    def x_block_bytes(tk):
        return B * tk * 128 * itemsize

    cands = sorted({K} | {t for t in range(8, K, 8) if K % t == 0}, reverse=True)
    for t in cands:
        if db_footprint(t) <= budget and x_block_bytes(t) <= target_x_block:
            return t
    return cands[-1]


# --------------------------------------------------------------------------
# Wrapper
# --------------------------------------------------------------------------
@functools.partial(jax.jit, static_argnames=("reverse", "training", "momentum"))
def batchnorm_flow(x_nchw, log_gamma, beta, running_mean, running_var,
                   logdet, *, reverse=False, training=True, momentum=0.1):
    """Pallas-backed BatchNormFlow forward.

    Returns (z [B,C,H,W], logdet, new_running_mean, new_running_var).
    """
    B, C, H, W = x_nchw.shape
    D = C * H * W
    in_dtype = x_nchw.dtype

    Dp = _round_up(D, 128)
    K = Dp // 128

    def pad_param(v, fill):
        v = v.reshape(-1).astype(jnp.float32)
        if Dp != D:
            v = jnp.concatenate([v, jnp.full((Dp - D,), fill, jnp.float32)])
        return v.reshape(K, 128)

    # Keep x in its native dtype (no wrapper-side upcast); kernels cast to f32.
    x = x_nchw.reshape(B, D)
    if Dp != D:
        x = jnp.pad(x, ((0, 0), (0, Dp - D)))
    x = x.reshape(B, K, 128)

    lg_p = pad_param(log_gamma, 0.0)
    bt_p = pad_param(beta, 0.0)
    rm_p = pad_param(running_mean, 0.0)
    rv_p = pad_param(running_var, 1.0)

    lg_flat = log_gamma.reshape(-1).astype(jnp.float32)
    rm_flat = running_mean.reshape(-1).astype(jnp.float32)
    rv_flat = running_var.reshape(-1).astype(jnp.float32)

    vmem_cap = _vmem_capacity_bytes()
    tile_k = _pick_tile_k(B, K, jnp.dtype(in_dtype).itemsize, vmem_cap)
    grid = (K // tile_k,)

    cparams = pltpu.CompilerParams(
        dimension_semantics=("parallel",),     # no cross-tile dependency left
        vmem_limit_bytes=vmem_cap // 2,
    )

    x_spec = pl.BlockSpec((B, tile_k, 128), lambda j: (0, j, 0))
    p_spec = pl.BlockSpec((tile_k, 128), lambda j: (j, 0))

    if training and not reverse:
        z, bmean, bvar = pl.pallas_call(
            _fwd_train_kernel,
            out_shape=(
                jax.ShapeDtypeStruct((B, K, 128), in_dtype),
                jax.ShapeDtypeStruct((K, 128), jnp.float32),
                jax.ShapeDtypeStruct((K, 128), jnp.float32),
            ),
            grid=grid,
            in_specs=[x_spec, p_spec, p_spec],
            out_specs=(x_spec, p_spec, p_spec),
            compiler_params=cparams,
        )(x, lg_p, bt_p)

        bmean = bmean.reshape(-1)[:D]
        bvar = bvar.reshape(-1)[:D]

        dlogdet = jnp.sum(lg_flat) - 0.5 * jnp.sum(jnp.log(bvar))
        new_logdet = None if logdet is None else logdet + dlogdet
        new_rm = momentum * rm_flat + (1.0 - momentum) * bmean
        new_rv = momentum * rv_flat + (1.0 - momentum) * bvar
    else:
        # Eval forward or reverse: running stats; precompute scale/shift in JAX.
        if not reverse:
            scale = jnp.exp(lg_p) * jax.lax.rsqrt(rv_p)
            shift = bt_p - scale * rm_p
        else:
            scale = jnp.sqrt(rv_p) * jnp.exp(-lg_p)
            shift = rm_p - bt_p * scale

        z = pl.pallas_call(
            _affine_kernel,
            out_shape=jax.ShapeDtypeStruct((B, K, 128), in_dtype),
            grid=grid,
            in_specs=[x_spec, p_spec, p_spec],
            out_specs=x_spec,
            compiler_params=cparams,
        )(x, scale, shift)

        dlogdet = jnp.sum(lg_flat) - 0.5 * jnp.sum(jnp.log(rv_flat))
        if reverse:
            new_logdet = None if logdet is None else logdet - dlogdet
        else:
            new_logdet = None if logdet is None else logdet + dlogdet
        new_rm, new_rv = rm_flat, rv_flat

    z = z.reshape(B, Dp)[:, :D].reshape(B, C, H, W)
    return (z, new_logdet,
            new_rm.reshape(1, C, H, W), new_rv.reshape(1, C, H, W))


# --------------------------------------------------------------------------
# Pure-JAX reference (mirrors the PyTorch module exactly)
# --------------------------------------------------------------------------
def ref_batchnorm_flow(x, lg, bt, rm, rv, logdet, *, reverse, training,
                       momentum=0.1):
    if training and not reverse:
        mean = x.mean(0)
        var = ((x - mean) ** 2).mean(0) + EPS
        new_rm = momentum * rm + (1.0 - momentum) * mean
        new_rv = momentum * rv + (1.0 - momentum) * var
    else:
        mean, var = rm, rv
        new_rm, new_rv = rm, rv
    dlogdet = jnp.sum(lg - 0.5 * jnp.log(var))
    if not reverse:
        x_hat = (x - mean) / jnp.sqrt(var)
        z = jnp.exp(lg) * x_hat + bt
        logdet = None if logdet is None else logdet + dlogdet
    else:
        x_hat = (x - bt) / jnp.exp(lg)
        z = x_hat * jnp.sqrt(var) + mean
        logdet = None if logdet is None else logdet - dlogdet
    return z, logdet, new_rm, new_rv


# --------------------------------------------------------------------------
if __name__ == "__main__":
    key = jax.random.PRNGKey(0)
    kx, kg, kb, kl = jax.random.split(key, 4)

    B, C, H, W = 2, 4, 16, 16
    x = jax.random.normal(kx, (B, C, H, W), dtype=jnp.float32)

    log_gamma = 0.05 * jax.random.normal(kg, (1, C, H, W), dtype=jnp.float32)
    beta = 0.05 * jax.random.normal(kb, (1, C, H, W), dtype=jnp.float32)
    running_mean = jnp.zeros((1, C, H, W), jnp.float32)
    running_var = jnp.ones((1, C, H, W), jnp.float32)
    logdet = jax.random.normal(kl, (B,), dtype=jnp.float32)

    # ---- training forward (reverse=False) ----
    z, ld, rm_new, rv_new = batchnorm_flow(
        x, log_gamma, beta, running_mean, running_var, logdet,
        reverse=False, training=True)
    jax.block_until_ready(z)

    z_ref, ld_ref, rm_ref, rv_ref = ref_batchnorm_flow(
        x, log_gamma, beta, running_mean, running_var, logdet,
        reverse=False, training=True)

    assert jnp.allclose(z, z_ref, atol=1e-5, rtol=1e-5), "forward z mismatch"
    assert jnp.allclose(ld, ld_ref, atol=1e-4, rtol=1e-5), "forward logdet mismatch"
    assert jnp.allclose(rm_new, rm_ref.reshape(1, C, H, W), atol=1e-6), "running_mean mismatch"
    assert jnp.allclose(rv_new, rv_ref.reshape(1, C, H, W), atol=1e-6), "running_var mismatch"

    # ---- reverse pass (uses running stats, matching the PyTorch module) ----
    zr, ldr, _, _ = batchnorm_flow(
        x, log_gamma, beta, running_mean, running_var, logdet,
        reverse=True, training=True)
    jax.block_until_ready(zr)

    zr_ref, ldr_ref, _, _ = ref_batchnorm_flow(
        x, log_gamma, beta, running_mean, running_var, logdet,
        reverse=True, training=True)

    assert jnp.allclose(zr, zr_ref, atol=1e-5, rtol=1e-5), "reverse z mismatch"
    assert jnp.allclose(ldr, ldr_ref, atol=1e-4, rtol=1e-5), "reverse logdet mismatch"

    # ---- eval forward (running stats, reverse=False) ----
    ze, lde, _, _ = batchnorm_flow(
        x, log_gamma, beta, running_mean, running_var, logdet,
        reverse=False, training=False)
    jax.block_until_ready(ze)

    ze_ref, lde_ref, _, _ = ref_batchnorm_flow(
        x, log_gamma, beta, running_mean, running_var, logdet,
        reverse=False, training=False)

    assert jnp.allclose(ze, ze_ref, atol=1e-5, rtol=1e-5), "eval z mismatch"
    assert jnp.allclose(lde, lde_ref, atol=1e-4, rtol=1e-5), "eval logdet mismatch"

    print("KERNEL_OK")
</pallas_src>

<mosaic_0001>
module attributes {stable_mosaic.version = 11 : i64} {
  func.func @_fwd_train_kernel(%arg0: i32, %arg1: memref<2x8x128xf32, #tpu.memory_space<vmem>>, %arg2: memref<8x128xf32, #tpu.memory_space<vmem>>, %arg3: memref<8x128xf32, #tpu.memory_space<vmem>>, %arg4: memref<2x8x128xf32, #tpu.memory_space<vmem>>, %arg5: memref<8x128xf32, #tpu.memory_space<vmem>>, %arg6: memref<8x128xf32, #tpu.memory_space<vmem>>) attributes {dimension_semantics = [#tpu.dimension_semantics<parallel>], iteration_bounds = array<i64: 1>, scalar_prefetch = 0 : i64, scratch_operands = 0 : i64, tpu.core_type = #tpu.core_type<tc>, window_params = [{transform_indices = @transform_0, window_bounds = array<i64: 2, 8, 128>}, {transform_indices = @transform_1, window_bounds = array<i64: 8, 128>}, {transform_indices = @transform_2, window_bounds = array<i64: 8, 128>}, {transform_indices = @transform_3, window_bounds = array<i64: 2, 8, 128>}, {transform_indices = @transform_4, window_bounds = array<i64: 8, 128>}, {transform_indices = @transform_5, window_bounds = array<i64: 8, 128>}]} {
    %c0 = arith.constant 0 : index
    %c0_0 = arith.constant 0 : index
    %c0_1 = arith.constant 0 : index
    %0 = vector.load %arg1[%c0, %c0_0, %c0_1] : memref<2x8x128xf32, #tpu.memory_space<vmem>>, vector<2x8x128xf32>
    %c0_2 = arith.constant 0 : index
    %c0_3 = arith.constant 0 : index
    %1 = vector.load %arg2[%c0_2, %c0_3] : memref<8x128xf32, #tpu.memory_space<vmem>>, vector<8x128xf32>
    %c0_4 = arith.constant 0 : index
    %c0_5 = arith.constant 0 : index
    %2 = vector.load %arg3[%c0_4, %c0_5] : memref<8x128xf32, #tpu.memory_space<vmem>>, vector<8x128xf32>
    %cst = arith.constant dense<0.000000e+00> : vector<8x128xf32>
    %3 = vector.multi_reduction <add>, %0, %cst [0] : vector<2x8x128xf32> to vector<8x128xf32>
    %cst_6 = arith.constant 5.000000e-01 : f32
    %4 = vector.broadcast %cst_6 : f32 to vector<8x128xf32>
    %5 = arith.mulf %3, %4 : vector<8x128xf32>
    %6 = vector.shape_cast %5 : vector<8x128xf32> to vector<1x8x128xf32>
    %7 = vector.broadcast %6 : vector<1x8x128xf32> to vector<2x8x128xf32>
    %8 = arith.subf %0, %7 : vector<2x8x128xf32>
    %9 = arith.mulf %8, %8 : vector<2x8x128xf32>
    %cst_7 = arith.constant dense<0.000000e+00> : vector<8x128xf32>
    %10 = vector.multi_reduction <add>, %9, %cst_7 [0] : vector<2x8x128xf32> to vector<8x128xf32>
    %cst_8 = arith.constant 5.000000e-01 : f32
    %11 = vector.broadcast %cst_8 : f32 to vector<8x128xf32>
    %12 = arith.mulf %10, %11 : vector<8x128xf32>
    %cst_9 = arith.constant 9.99999974E-6 : f32
    %13 = vector.broadcast %cst_9 : f32 to vector<8x128xf32>
    %14 = arith.addf %12, %13 : vector<8x128xf32>
    %15 = math.rsqrt %14 : vector<8x128xf32>
    %16 = math.exp %1 : vector<8x128xf32>
    %17 = arith.mulf %16, %15 : vector<8x128xf32>
    %18 = arith.mulf %17, %5 : vector<8x128xf32>
    %19 = arith.subf %2, %18 : vector<8x128xf32>
    %20 = vector.shape_cast %17 : vector<8x128xf32> to vector<1x8x128xf32>
    %21 = vector.broadcast %20 : vector<1x8x128xf32> to vector<2x8x128xf32>
    %22 = arith.mulf %0, %21 : vector<2x8x128xf32>
    %23 = vector.shape_cast %19 : vector<8x128xf32> to vector<1x8x128xf32>
    %24 = vector.broadcast %23 : vector<1x8x128xf32> to vector<2x8x128xf32>
    %25 = arith.addf %22, %24 : vector<2x8x128xf32>
    %c0_10 = arith.constant 0 : index
    %c0_11 = arith.constant 0 : index
    %c0_12 = arith.constant 0 : index
    %26 = vector.load %arg4[%c0_10, %c0_11, %c0_12] : memref<2x8x128xf32, #tpu.memory_space<vmem>>, vector<2x8x128xf32>
    tpu.vector_store %arg4[%c0_10, %c0_11, %c0_12], %25 {strides = array<i32>} : memref<2x8x128xf32, #tpu.memory_space<vmem>>, vector<2x8x128xf32>,
    %c0_13 = arith.constant 0 : index
    %c0_14 = arith.constant 0 : index
    %27 = vector.load %arg5[%c0_13, %c0_14] : memref<8x128xf32, #tpu.memory_space<vmem>>, vector<8x128xf32>
    tpu.vector_store %arg5[%c0_13, %c0_14], %5 {strides = array<i32>} : memref<8x128xf32, #tpu.memory_space<vmem>>, vector<8x128xf32>,
    %c0_15 = arith.constant 0 : index
    %c0_16 = arith.constant 0 : index
    %28 = vector.load %arg6[%c0_15, %c0_16] : memref<8x128xf32, #tpu.memory_space<vmem>>, vector<8x128xf32>
    tpu.vector_store %arg6[%c0_15, %c0_16], %14 {strides = array<i32>} : memref<8x128xf32, #tpu.memory_space<vmem>>, vector<8x128xf32>,
    return
  }
  func.func @transform_0(%arg0: i32) -> (i32, i32, i32) {
    %c0_i32 = arith.constant 0 : i32
    %c0_i32_0 = arith.constant 0 : i32
    %c0_i32_1 = arith.constant 0 : i32
    return %c0_i32, %arg0, %c0_i32_0 : i32, i32, i32
  }
  func.func @transform_1(%arg0: i32) -> (i32, i32) {
    %c0_i32 = arith.constant 0 : i32
    %c0_i32_0 = arith.constant 0 : i32
    return %arg0, %c0_i32 : i32, i32
  }
  func.func @transform_2(%arg0: i32) -> (i32, i32) {
    %c0_i32 = arith.constant 0 : i32
    %c0_i32_0 = arith.constant 0 : i32
    return %arg0, %c0_i32 : i32, i32
  }
  func.func @transform_3(%arg0: i32) -> (i32, i32, i32) {
    %c0_i32 = arith.constant 0 : i32
    %c0_i32_0 = arith.constant 0 : i32
    %c0_i32_1 = arith.constant 0 : i32
    return %c0_i32, %arg0, %c0_i32_0 : i32, i32, i32
  }
  func.func @transform_4(%arg0: i32) -> (i32, i32) {
    %c0_i32 = arith.constant 0 : i32
    %c0_i32_0 = arith.constant 0 : i32
    return %arg0, %c0_i32 : i32, i32
  }
  func.func @transform_5(%arg0: i32) -> (i32, i32) {
    %c0_i32 = arith.constant 0 : i32
    %c0_i32_0 = arith.constant 0 : i32
    return %arg0, %c0_i32 : i32, i32
  }
}

</mosaic_0001>

<llo_original>
// kernel: batchnorm_flow.1
$region0: #{batchnorm_flow.1}
  #allocation0 [shape = 'u32[]', space=smem, size = 0x4, offset = 0x4, fixed_abs, tag = 'smem constant byte address 0x4 - core index']
  #allocation1 [shape = 'u32[144,128]{1,0:T(1,128)}', space=vmem, size = 0x12000, scoped, tag = 'internal scratch']
  %s0 = inlined_call_operand.vmem [shape: f32[2,8,128], index: 0, kind: input, shape index: {}]
  %s1 = inlined_call_operand.vmem [shape: f32[8,128], index: 1, kind: input, shape index: {}]
  %s2 = inlined_call_operand.vmem [shape: f32[8,128], index: 2, kind: input, shape index: {}]
  %s3 = inlined_call_operand.vmem [shape: f32[2,8,128], index: 3, kind: output, shape index: {0}]
  %s4 = inlined_call_operand.vmem [shape: f32[8,128], index: 4, kind: output, shape index: {1}]
  %s5 = inlined_call_operand.vmem [shape: f32[8,128], index: 5, kind: output, shape index: {2}]
  %6 = xla_tuple %s3, %s4, %s5
  %s7 = sld [smem:[#allocation0]]
  $region38: #{batchnorm_flow.1} parent=0
    _
  %s9 = ssub.s32 1, %s7
  %s10 = scalar_select 0, %s9, %s7
  // Predicated region
  $region2: #{batchnorm_flow.1} parent=0 // pred_check
    _
  $region3: #{batchnorm_flow.1} parent=0 // pred_check_branch
    %12 = sbr.rel (0) target = $region5
  $region4: #{batchnorm_flow.1} parent=0 // pred_region
    _
  $region5: #{batchnorm_flow.1} parent=0 // pred_fallthru
    _
  // Predicated region
  $region6: #{batchnorm_flow.1} parent=0 // pred_check
    _
  $region7: #{batchnorm_flow.1} parent=0 // pred_check_branch
    %14 = sbr.rel (0) target = $region9
  $region8: #{batchnorm_flow.1} parent=0 // pred_region
    _
  $region9: #{batchnorm_flow.1} parent=0 // pred_fallthru
    _
  // Predicated region
  $region10: #{batchnorm_flow.1} parent=0 // pred_check
    _
  $region11: #{batchnorm_flow.1} parent=0 // pred_check_branch
    %16 = sbr.rel (0) target = $region13
  $region12: #{batchnorm_flow.1} parent=0 // pred_region
    _
  $region13: #{batchnorm_flow.1} parent=0 // pred_fallthru
    _
  %v17 = vld [vmem:[%s0] sm:$0xff]
  %v18 = vld [vmem:[%s0 + $0x8] sm:$0xff]
  %v19 = vld [vmem:[%s1] sm:$0xff]
  %v20 = vld [vmem:[%s2] sm:$0xff]
  %v21 = vadd.f32 %v17, %v18
  %v22 = vmul.f32 %v21, 0.5
  %v23 = vsub.f32 %v17, %v22
  %v24 = vsub.f32 %v18, %v22
  %v25 = vmul.f32 %v23, %v23
  %v26 = vmul.f32 %v24, %v24
  %v27 = vadd.f32 %v25, %v26
  %v28 = vmul.f32 %v27, 0.5
  %v29 = vadd.f32 %v28, 1e-05
  %v30 = vrsqrt.pop %v29
  %v31 = vmul.f32 %v19, 1.442695
  %v32 = vpow.pop %v31
  %v33 = vmul.f32 %v32, %v30
  %v34 = vmul.f32 %v33, %v22
  %v35 = vsub.f32 %v20, %v34
  %v36 = vmul.f32 %v17, %v33
  %v37 = vmul.f32 %v18, %v33
  %v38 = vadd.f32 %v36, %v35
  %v39 = vadd.f32 %v37, %v35
  %40 = vst [vmem:[%s3] sm:$0xff] %v38
  %41 = vst [vmem:[%s3 + $0x8] sm:$0xff] %v39
  %42 = vst [vmem:[%s4] sm:$0xff] %v22
  %43 = vst [vmem:[%s5] sm:$0xff] %v29
  // Predicated region
  $region14: #{batchnorm_flow.1} parent=0 // pred_check
    _
  $region15: #{batchnorm_flow.1} parent=0 // pred_check_branch
    %45 = sbr.rel (0) target = $region17
  $region16: #{batchnorm_flow.1} parent=0 // pred_region
    _
  $region17: #{batchnorm_flow.1} parent=0 // pred_fallthru
    _
  // Predicated region
  $region18: #{batchnorm_flow.1} parent=0 // pred_check
    _
  $region19: #{batchnorm_flow.1} parent=0 // pred_check_branch
    %47 = sbr.rel (0) target = $region21
  $region20: #{batchnorm_flow.1} parent=0 // pred_region
    _
  $region21: #{batchnorm_flow.1} parent=0 // pred_fallthru
    _
  // Predicated region
  $region22: #{batchnorm_flow.1} parent=0 // pred_check
    _
  $region23: #{batchnorm_flow.1} parent=0 // pred_check_branch
    %49 = sbr.rel (0) target = $region25
  $region24: #{batchnorm_flow.1} parent=0 // pred_region
    _
  $region25: #{batchnorm_flow.1} parent=0 // pred_fallthru
    _
  // Predicated region
  $region26: #{batchnorm_flow.1} parent=0 // pred_check
    _
  $region27: #{batchnorm_flow.1} parent=0 // pred_check_branch
    %51 = sbr.rel (0) target = $region29
  $region28: #{batchnorm_flow.1} parent=0 // pred_region
    _
  $region29: #{batchnorm_flow.1} parent=0 // pred_fallthru
    _
  // Predicated region
  $region30: #{batchnorm_flow.1} parent=0 // pred_check
    _
  $region31: #{batchnorm_flow.1} parent=0 // pred_check_branch
    %53 = sbr.rel (0) target = $region33
  $region32: #{batchnorm_flow.1} parent=0 // pred_region
    _
  $region33: #{batchnorm_flow.1} parent=0 // pred_fallthru
    _
  // Predicated region
  $region34: #{batchnorm_flow.1} parent=0 // pred_check
    _
  $region35: #{batchnorm_flow.1} parent=0 // pred_check_branch
    %55 = sbr.rel (0) target = $region37
  $region36: #{batchnorm_flow.1} parent=0 // pred_region
    _
  $region37: #{batchnorm_flow.1} parent=0 // pred_fallthru
    _

</llo_original>
